<compile_context>
chip_gen: v5e
topology: v5e:2x2
jax: 0.10.0
libtpu: 0.0.40
codegen_flags: <defaults>
</compile_context>

<pallas_src>
import functools

import jax
import jax.numpy as jnp
from jax import lax
from jax.experimental import pallas as pl
from jax.experimental.pallas import tpu as pltpu


def _loc_attn_kernel(base_ref, enc_ref, wcomb_ref, wrow_ref, attn_ref, ctx_ref, *, smoothing):
    enc = enc_ref[...]                                    # [Bb, T, K] = [enc | x[t-1],x[t],x[t+1] | 0]
    bb, t, k = enc.shape
    a = wcomb_ref.shape[1]

    # ---- single MXU matmul over all Bb*T rows; the conv term rides along as extra K columns ----
    proj = jnp.dot(enc.reshape(bb * t, k), wcomb_ref[...],
                   preferred_element_type=jnp.float32).reshape(bb, t, a)    # [Bb, T, A] f32

    # ---- energy = w^T tanh(base + [V|Ucomb] enc_aug);  VPU multiply + lane (XLU) reduce ----
    hidden = jnp.tanh(proj + base_ref[...][:, None, :])                     # [Bb, T, A]
    energy = jnp.sum(hidden * wrow_ref[...], axis=-1)                       # [Bb, T]  (T on lanes)

    # ---- normalisation in the lane-dense [Bb, T] layout ----
    if smoothing:
        p = jax.nn.sigmoid(energy)
    else:
        p = jnp.exp(energy - jnp.max(energy, axis=-1, keepdims=True))
    attn = p / jnp.sum(p, axis=-1, keepdims=True)                           # [Bb, T] f32

    attn_ref[...] = attn                                                    # dense [Bb, T] store
    # context = sum_t attn[t] * enc_aug[t, :]  (sublane reduce; K stays on lanes)
    ctx_ref[...] = jnp.sum(attn[:, :, None] * enc, axis=1)                  # dense [Bb, K] store


def _vmem_budget():
    """(planning budget bytes, vmem_limit_bytes to request) for this TPU generation."""
    cap = 64 * 1024 * 1024                 # conservative default (v7x per-TC VMEM)
    try:
        cap = int(pltpu.get_tpu_info().vmem_capacity_bytes)
    except Exception:
        pass
    limit = int(cap * 3 // 4)              # scoped limit requested from the compiler (headroom)
    budget = int(limit * 17 // 20)         # what we plan blocks against (85% of the limit)
    return budget, limit


def _choose_tiling(B, T, K, A, mm_itemsize, vmem_budget):
    """Pick batches-per-block so b_blk*T ≈ 512 MXU rows and everything fits the VMEM budget."""
    per_b = (2 * T * K * mm_itemsize       # double-buffered enc_aug block
             + 3 * T * A * 4               # live f32 intermediates (proj / hidden / products)
             + 2 * A * 4                   # base block (double-buffered)
             + 2 * (T + K) * 4)            # attn / ctx output blocks (double-buffered)
    fixed = 2 * (K * A * mm_itemsize + A * 4)   # wcomb + wrow: constant index_map but double-buffered
    b_vmem = max(1, (vmem_budget - fixed) // per_b)
    b_rows = max(1, 512 // max(T, 1))      # ~512 rows per step fills the MXU M dimension
    b_blk = int(max(1, min(B, b_rows, b_vmem)))
    grid_b = -(-B // b_blk)                # cdiv
    if grid_b > 1 and grid_b % 2:
        grid_b += 1                        # even step count so both v7x TensorCores get equal work
    b_blk = -(-B // grid_b)                # rebalance (only shrinks, so the VMEM cap still holds)
    return int(b_blk), int(grid_b)


def loc_aware_attn(decoder_state, encoder_feature, last_align, params, smoothing=False,
                   use_bf16=False):
    B, _, Dd = decoder_state.shape
    _, T, E = encoder_feature.shape
    A = params["W"].shape[0]
    f32 = jnp.float32

    dec = decoder_state.astype(f32)
    enc = encoder_feature.astype(f32)
    align = last_align.astype(f32)

    # ---- fold weights once in the wrapper (tiny XLA ops) ----
    u_t = jnp.transpose(params["U"]).astype(f32)                            # [C, A]
    ucomb = jnp.transpose(params["conv_w"][:, 0, :]).astype(f32) @ u_t      # [3, A]
    bias = params["conv_b"].astype(f32)[None, :] @ u_t + params["b"].astype(f32)[None, :]
    base = dec[:, 0, :] @ jnp.transpose(params["W"]).astype(f32) + bias     # [B, A] = W s + U conv_b + b

    # encoder-side weight with the conv taps stacked under V^T; K padded to a sublane multiple
    K_raw = E + 3
    K = ((K_raw + 7) // 8) * 8
    wcomb = jnp.concatenate(
        [jnp.transpose(params["V"]).astype(f32), ucomb,
         jnp.zeros((K - K_raw, A), f32)], axis=0)                           # [K, A]
    wrow = params["w"].astype(f32)                                          # [1, A]

    # augmented encoder: [enc | x[t-1] | x[t] | x[t+1] | 0-pad]   (conv k=3, pad=1 taps)
    ap_prev = jnp.pad(align[:, :-1], ((0, 0), (1, 0)))
    ap_next = jnp.pad(align[:, 1:], ((0, 0), (0, 1)))
    enc_aug = jnp.concatenate(
        [enc, ap_prev[:, :, None], align[:, :, None], ap_next[:, :, None],
         jnp.zeros((B, T, K - K_raw), f32)], axis=-1)                       # [B, T, K]

    mm_dtype = jnp.bfloat16 if use_bf16 else f32                            # bf16 halves enc HBM traffic
    enc_aug = enc_aug.astype(mm_dtype)
    wcomb = wcomb.astype(mm_dtype)

    # ---- tile-size derivation + VMEM limit ----
    vmem_budget, vmem_limit = _vmem_budget()
    b_blk, grid_b = _choose_tiling(B, T, K, A, jnp.dtype(mm_dtype).itemsize, vmem_budget)
    B_pad = b_blk * grid_b
    if B_pad != B:                         # zero-padded batches: energy=0 -> uniform attn, ctx=0 (finite)
        base = jnp.pad(base, ((0, B_pad - B), (0, 0)))
        enc_aug = jnp.pad(enc_aug, ((0, B_pad - B), (0, 0), (0, 0)))

    base_g = base.reshape(grid_b, b_blk, A)
    enc_g = enc_aug.reshape(grid_b, b_blk, T, K)

    kernel = functools.partial(_loc_attn_kernel, smoothing=smoothing)

    attn_g, ctx_g = pl.pallas_call(
        kernel,
        out_shape=(jax.ShapeDtypeStruct((grid_b, b_blk, T), f32),
                   jax.ShapeDtypeStruct((grid_b, b_blk, K), f32)),
        grid=(grid_b,),
        in_specs=[
            pl.BlockSpec((None, b_blk, A), lambda i: (i, 0, 0)),
            pl.BlockSpec((None, b_blk, T, K), lambda i: (i, 0, 0, 0)),
            pl.BlockSpec((K, A), lambda i: (0, 0)),
            pl.BlockSpec((1, A), lambda i: (0, 0)),
        ],
        out_specs=[
            pl.BlockSpec((None, b_blk, T), lambda i: (i, 0, 0)),
            pl.BlockSpec((None, b_blk, K), lambda i: (i, 0, 0)),
        ],
        compiler_params=pltpu.CompilerParams(
            dimension_semantics=("parallel",),
            vmem_limit_bytes=vmem_limit),
    )(base_g, enc_g, wcomb, wrow)

    attn = attn_g.reshape(B_pad, T)[:B]
    ctx = ctx_g.reshape(B_pad, K)[:B, :E]
    return attn, ctx


def reference(decoder_state, encoder_feature, last_align, params, smoothing=False):
    """Pure-JAX reference mirroring the PyTorch forward."""
    conv = lax.conv_general_dilated(
        last_align[:, None, :], params["conv_w"], window_strides=(1,),
        padding=[(1, 1)], dimension_numbers=("NCH", "OIH", "NCH"))
    conv = conv + params["conv_b"][None, :, None]
    conv_feat = jnp.transpose(conv, (0, 2, 1))                              # [B, T, C]
    energy = (jnp.tanh(decoder_state @ params["W"].T
                       + encoder_feature @ params["V"].T
                       + conv_feat @ params["U"].T
                       + params["b"]) @ params["w"].T)[..., 0]              # [B, T]
    if smoothing:
        e = jax.nn.sigmoid(energy)
        attn = e / jnp.sum(e, axis=-1, keepdims=True)
    else:
        attn = jax.nn.softmax(energy, axis=-1)
    ctx = jnp.einsum("bt,bte->be", attn, encoder_feature)
    return attn, ctx


def _make_case(key, B, T, E, Dd, C, A):
    ks = jax.random.split(key, 10)
    params = {
        "conv_w": jax.random.normal(ks[0], (C, 1, 3), jnp.float32) * 0.3,   # Conv1d weight [out,in,k]
        "conv_b": jax.random.normal(ks[1], (C,), jnp.float32) * 0.1,        # Conv1d bias
        "W": jax.random.normal(ks[2], (A, Dd), jnp.float32) * 0.1,          # Linear(dec_hidden, attn)
        "V": jax.random.normal(ks[3], (A, E), jnp.float32) * 0.1,           # Linear(enc_feat, attn)
        "U": jax.random.normal(ks[4], (A, C), jnp.float32) * 0.1,           # Linear(conv_dim, attn)
        "b": jax.random.uniform(ks[5], (A,), jnp.float32),                  # nn.Parameter(torch.rand(attn))
        "w": jax.random.normal(ks[6], (1, A), jnp.float32) * 0.1,           # Linear(attn, 1)
    }
    decoder_state = jax.random.normal(ks[7], (B, 1, Dd), jnp.float32)
    encoder_feature = jax.random.normal(ks[8], (B, T, E), jnp.float32)
    last_align = jax.nn.softmax(jax.random.normal(ks[9], (B, T), jnp.float32), axis=-1)
    return params, decoder_state, encoder_feature, last_align


if __name__ == "__main__":
    key = jax.random.PRNGKey(0)
    k0, k1 = jax.random.split(key)

    # small shapes consistent with the module: batch=2, enc_len=16, enc_feat=32,
    # dec_hidden=32, conv_dim=8, attn_dim=32   (collapses to grid=(1,))
    params, dec, enc, align = _make_case(k0, B=2, T=16, E=32, Dd=32, C=8, A=32)
    for smoothing in (False, True):
        attn, ctx = loc_aware_attn(dec, enc, align, params, smoothing=smoothing)
        jax.block_until_ready((attn, ctx))
        r_attn, r_ctx = reference(dec, enc, align, params, smoothing=smoothing)
        assert attn.shape == (2, 16) and ctx.shape == (2, 32)
        assert jnp.allclose(attn, r_attn, atol=1e-5, rtol=1e-5), f"attn mismatch (smoothing={smoothing})"
        assert jnp.allclose(ctx, r_ctx, atol=1e-4, rtol=1e-4), f"context mismatch (smoothing={smoothing})"

    # second shape exercising the derived tiling: multi-step (even) grid + batch padding
    params, dec, enc, align = _make_case(k1, B=70, T=16, E=32, Dd=32, C=8, A=32)
    attn, ctx = loc_aware_attn(dec, enc, align, params, smoothing=False)
    jax.block_until_ready((attn, ctx))
    r_attn, r_ctx = reference(dec, enc, align, params, smoothing=False)
    assert attn.shape == (70, 16) and ctx.shape == (70, 32)
    assert jnp.allclose(attn, r_attn, atol=1e-5, rtol=1e-5), "attn mismatch (multi-step grid)"
    assert jnp.allclose(ctx, r_ctx, atol=1e-4, rtol=1e-4), "context mismatch (multi-step grid)"

    print("KERNEL_OK")
</pallas_src>

<mosaic_0001>
module attributes {stable_mosaic.version = 11 : i64} {
  func.func @_loc_attn_kernel(%arg0: i32, %arg1: memref<1x2x32xf32, #tpu.memory_space<vmem>>, %arg2: memref<1x2x16x40xf32, #tpu.memory_space<vmem>>, %arg3: memref<40x32xf32, #tpu.memory_space<vmem>>, %arg4: memref<1x32xf32, #tpu.memory_space<vmem>>, %arg5: memref<1x2x16xf32, #tpu.memory_space<vmem>>, %arg6: memref<1x2x40xf32, #tpu.memory_space<vmem>>) attributes {dimension_semantics = [#tpu.dimension_semantics<parallel>], iteration_bounds = array<i64: 1>, scalar_prefetch = 0 : i64, scratch_operands = 0 : i64, tpu.core_type = #tpu.core_type<tc>, window_params = [{transform_indices = @transform_0, window_bounds = array<i64: 1, 2, 32>}, {transform_indices = @transform_1, window_bounds = array<i64: 1, 2, 16, 40>}, {pipeline_mode = #tpu.pipeline_mode<synchronous>, transform_indices = @transform_2, window_bounds = array<i64: 40, 32>}, {pipeline_mode = #tpu.pipeline_mode<synchronous>, transform_indices = @transform_3, window_bounds = array<i64: 1, 32>}, {transform_indices = @transform_4, window_bounds = array<i64: 1, 2, 16>}, {transform_indices = @transform_5, window_bounds = array<i64: 1, 2, 40>}]} {
    %c0 = arith.constant 0 : index
    %c0_0 = arith.constant 0 : index
    %c0_1 = arith.constant 0 : index
    %c0_2 = arith.constant 0 : index
    %0 = vector.load %arg2[%c0, %c0_0, %c0_1, %c0_2] : memref<1x2x16x40xf32, #tpu.memory_space<vmem>>, vector<1x2x16x40xf32>
    %1 = vector.shape_cast %0 : vector<1x2x16x40xf32> to vector<2x16x40xf32>
    %2 = vector.shape_cast %1 : vector<2x16x40xf32> to vector<32x40xf32>
    %c0_3 = arith.constant 0 : index
    %c0_4 = arith.constant 0 : index
    %3 = vector.load %arg3[%c0_3, %c0_4] : memref<40x32xf32, #tpu.memory_space<vmem>>, vector<40x32xf32>
    %cst = arith.constant dense<0.000000e+00> : vector<32x32xf32>
    %4 = tpu.matmul %2, %3, %cst {dimension_numbers = #tpu.dot_dimension_numbers<[1], [0], [0], [1], [0, 0, 1, 1], [], []>} : vector<32x40xf32>, vector<40x32xf32>, vector<32x32xf32> -> vector<32x32xf32>
    %5 = vector.shape_cast %4 : vector<32x32xf32> to vector<2x16x32xf32>
    %c0_5 = arith.constant 0 : index
    %c0_6 = arith.constant 0 : index
    %c0_7 = arith.constant 0 : index
    %6 = vector.load %arg1[%c0_5, %c0_6, %c0_7] : memref<1x2x32xf32, #tpu.memory_space<vmem>>, vector<1x2x32xf32>
    %7 = vector.shape_cast %6 : vector<1x2x32xf32> to vector<2x32xf32>
    %8 = vector.shape_cast %7 : vector<2x32xf32> to vector<2x1x32xf32>
    %9 = vector.broadcast %8 : vector<2x1x32xf32> to vector<2x16x32xf32>
    %10 = arith.addf %5, %9 : vector<2x16x32xf32>
    %11 = math.tanh %10 : vector<2x16x32xf32>
    %c0_8 = arith.constant 0 : index
    %c0_9 = arith.constant 0 : index
    %12 = vector.load %arg4[%c0_8, %c0_9] : memref<1x32xf32, #tpu.memory_space<vmem>>, vector<1x32xf32>
    %13 = vector.shape_cast %12 : vector<1x32xf32> to vector<1x1x32xf32>
    %14 = vector.broadcast %13 : vector<1x1x32xf32> to vector<2x16x32xf32>
    %15 = arith.mulf %11, %14 : vector<2x16x32xf32>
    %cst_10 = arith.constant dense<0.000000e+00> : vector<2x16xf32>
    %16 = vector.multi_reduction <add>, %15, %cst_10 [2] : vector<2x16x32xf32> to vector<2x16xf32>
    %cst_11 = arith.constant dense<0xFF800000> : vector<2xf32>
    %17 = vector.multi_reduction <maximumf>, %16, %cst_11 [1] : vector<2x16xf32> to vector<2xf32>
    %18 = vector.shape_cast %17 : vector<2xf32> to vector<2x1xf32>
    %19 = vector.broadcast %18 : vector<2x1xf32> to vector<2x16xf32>
    %20 = arith.subf %16, %19 : vector<2x16xf32>
    %21 = math.exp %20 : vector<2x16xf32>
    %cst_12 = arith.constant dense<0.000000e+00> : vector<2xf32>
    %22 = vector.multi_reduction <add>, %21, %cst_12 [1] : vector<2x16xf32> to vector<2xf32>
    %23 = vector.shape_cast %22 : vector<2xf32> to vector<2x1xf32>
    %24 = vector.broadcast %23 : vector<2x1xf32> to vector<2x16xf32>
    %25 = arith.divf %21, %24 : vector<2x16xf32>
    %c0_13 = arith.constant 0 : index
    %c0_14 = arith.constant 0 : index
    %c0_15 = arith.constant 0 : index
    %26 = vector.load %arg5[%c0_13, %c0_14, %c0_15] : memref<1x2x16xf32, #tpu.memory_space<vmem>>, vector<1x2x16xf32>
    %27 = vector.shape_cast %26 : vector<1x2x16xf32> to vector<2x16xf32>
    %28 = vector.shape_cast %25 : vector<2x16xf32> to vector<1x2x16xf32>
    tpu.vector_store %arg5[%c0_13, %c0_14, %c0_15], %28 {strides = array<i32>} : memref<1x2x16xf32, #tpu.memory_space<vmem>>, vector<1x2x16xf32>,
    %29 = vector.shape_cast %25 : vector<2x16xf32> to vector<2x16x1xf32>
    %30 = vector.broadcast %29 : vector<2x16x1xf32> to vector<2x16x40xf32>
    %31 = arith.mulf %30, %1 : vector<2x16x40xf32>
    %cst_16 = arith.constant dense<0.000000e+00> : vector<2x40xf32>
    %32 = vector.multi_reduction <add>, %31, %cst_16 [1] : vector<2x16x40xf32> to vector<2x40xf32>
    %c0_17 = arith.constant 0 : index
    %c0_18 = arith.constant 0 : index
    %c0_19 = arith.constant 0 : index
    %33 = vector.load %arg6[%c0_17, %c0_18, %c0_19] : memref<1x2x40xf32, #tpu.memory_space<vmem>>, vector<1x2x40xf32>
    %34 = vector.shape_cast %33 : vector<1x2x40xf32> to vector<2x40xf32>
    %35 = vector.shape_cast %32 : vector<2x40xf32> to vector<1x2x40xf32>
    tpu.vector_store %arg6[%c0_17, %c0_18, %c0_19], %35 {strides = array<i32>} : memref<1x2x40xf32, #tpu.memory_space<vmem>>, vector<1x2x40xf32>,
    return
  }
  func.func @transform_0(%arg0: i32) -> (i32, i32, i32) {
    %c0_i32 = arith.constant 0 : i32
    %c0_i32_0 = arith.constant 0 : i32
    %c0_i32_1 = arith.constant 0 : i32
    return %arg0, %c0_i32, %c0_i32_0 : i32, i32, i32
  }
  func.func @transform_1(%arg0: i32) -> (i32, i32, i32, i32) {
    %c0_i32 = arith.constant 0 : i32
    %c0_i32_0 = arith.constant 0 : i32
    %c0_i32_1 = arith.constant 0 : i32
    %c0_i32_2 = arith.constant 0 : i32
    return %arg0, %c0_i32, %c0_i32_0, %c0_i32_1 : i32, i32, i32, i32
  }
  func.func @transform_2(%arg0: i32) -> (i32, i32) {
    %c0_i32 = arith.constant 0 : i32
    %c0_i32_0 = arith.constant 0 : i32
    %c0_i32_1 = arith.constant 0 : i32
    return %c0_i32, %c0_i32_0 : i32, i32
  }
  func.func @transform_3(%arg0: i32) -> (i32, i32) {
    %c0_i32 = arith.constant 0 : i32
    %c0_i32_0 = arith.constant 0 : i32
    %c0_i32_1 = arith.constant 0 : i32
    return %c0_i32, %c0_i32_0 : i32, i32
  }
  func.func @transform_4(%arg0: i32) -> (i32, i32, i32) {
    %c0_i32 = arith.constant 0 : i32
    %c0_i32_0 = arith.constant 0 : i32
    %c0_i32_1 = arith.constant 0 : i32
    return %arg0, %c0_i32, %c0_i32_0 : i32, i32, i32
  }
  func.func @transform_5(%arg0: i32) -> (i32, i32, i32) {
    %c0_i32 = arith.constant 0 : i32
    %c0_i32_0 = arith.constant 0 : i32
    %c0_i32_1 = arith.constant 0 : i32
    return %arg0, %c0_i32, %c0_i32_0 : i32, i32, i32
  }
}

</mosaic_0001>

<llo_original>
// kernel: tpu_custom_call.1
$region0: #{tpu_custom_call.1}
  #allocation0 [shape = 'u32[]', space=smem, size = 0x4, offset = 0x4, fixed_abs, tag = 'smem constant byte address 0x4 - core index']
  #allocation1 [shape = 'u32[72,128]{1,0:T(1,128)}', space=vmem, size = 0x9000, scoped, tag = 'internal scratch']
  %s0 = inlined_call_operand.vmem [shape: f32[1,2,32], index: 0, kind: input, shape index: {}]
  %s1 = inlined_call_operand.vmem [shape: f32[1,2,16,40], index: 1, kind: input, shape index: {}]
  %s2 = inlined_call_operand.vmem [shape: f32[40,32], index: 2, kind: input, shape index: {}]
  %s3 = inlined_call_operand.vmem [shape: f32[1,32], index: 3, kind: input, shape index: {}]
  %s4 = inlined_call_operand.hbm [shape: f32[1,2,16], index: 4, kind: output, shape index: {0}]
  %s5 = inlined_call_operand.hbm [shape: f32[1,2,40], index: 5, kind: output, shape index: {1}]
  %6 = xla_tuple %s4, %s5
  %s7 = sld [smem:[#allocation0]]
  $region34: #{tpu_custom_call.1} parent=0
    _
  %s9 = ssub.s32 1, %s7
  %s10 = scalar_select 0, %s9, %s7
  $region1: #{tpu_custom_call.1} parent=0
    #allocation2 [shape = 'u8[1024]{0}', space=vmem, size = 0x400, scoped, tag = 'output window, operand 0, single buffered']
    #allocation3 [shape = 's32[1]{0}', space=sflag, size = 0x4, scoped, tag = 'scoped memory for tpu_custom_call.1']
    #allocation4 [shape = 'u8[1024]{0}', space=vmem, size = 0x400, scoped, tag = 'output window, operand 1, single buffered']
    #allocation5 [shape = 's32[1]{0}', space=sflag, size = 0x4, scoped, tag = 'scoped memory for tpu_custom_call.1']
    %11 = vsyncpa [#allocation3], 0
    %12 = vsyncpa [#allocation5], 0
    // Predicated region
    $region2: #{tpu_custom_call.1} parent=1 // pred_check
      _
    $region3: #{tpu_custom_call.1} parent=1 // pred_check_branch
      %14 = sbr.rel (0) target = $region5
    $region4: #{tpu_custom_call.1} parent=1 // pred_region
      _
    $region5: #{tpu_custom_call.1} parent=1 // pred_fallthru
      _
    // Predicated region
    $region6: #{tpu_custom_call.1} parent=1 // pred_check
      _
    $region7: #{tpu_custom_call.1} parent=1 // pred_check_branch
      %16 = sbr.rel (0) target = $region9
    $region8: #{tpu_custom_call.1} parent=1 // pred_region
      _
    $region9: #{tpu_custom_call.1} parent=1 // pred_fallthru
      _
    // Predicated region
    $region10: #{tpu_custom_call.1} parent=1 // pred_check
      _
    $region11: #{tpu_custom_call.1} parent=1 // pred_check_branch
      %18 = sbr.rel (0) target = $region13
    $region12: #{tpu_custom_call.1} parent=1 // pred_region
      _
    $region13: #{tpu_custom_call.1} parent=1 // pred_fallthru
      _
    // Predicated region
    $region14: #{tpu_custom_call.1} parent=1 // pred_check
      _
    $region15: #{tpu_custom_call.1} parent=1 // pred_check_branch
      %20 = sbr.rel (0) target = $region17
    $region16: #{tpu_custom_call.1} parent=1 // pred_region
      _
    $region17: #{tpu_custom_call.1} parent=1 // pred_fallthru
      _
    %v21 = vld [vmem:[%s1] sm:$0xff]
    %v22 = vld [vmem:[%s1 + $0x8] sm:$0xff]
    %v23 = vld [vmem:[%s1 + $0x10] sm:$0xff]
    %v24 = vld [vmem:[%s1 + $0x18] sm:$0xff]
    %v25 = vld [vmem:[%s2] sm:$0xff]
    %v26 = vld [vmem:[%s2 + $0x8] sm:$0xff]
    %v27 = vld [vmem:[%s2 + $0x10] sm:$0xff]
    %v28 = vld [vmem:[%s2 + $0x18] sm:$0xff]
    %v29 = vld [vmem:[%s2 + $0x20] sm:$0xff]
    %vm30 = vcmask 326656
    %v32 = vsel %vm30, %v21, 0
    %v35 = vsel %vm30, %v22, 0
    %v38 = vsel %vm30, %v23, 0
    %v41 = vsel %vm30, %v24, 0
    %43 = vmatpush.msra.mxu0 0.0
    %44 = vmatpush.msra.mxu0 0.0
    %45 = vmatpush.msra.mxu0 0.0
    %46 = vmatpush.msra.mxu0 0.0
    %47 = vmatpush.msra.mxu0 0.0
    %48 = vmatpush.msra.mxu0 0.0
    %49 = vmatpush.msra.mxu0 0.0
    %50 = vmatpush.msra.mxu0 0.0
    %51 = vmatpush.msra.mxu0 0.0
    %52 = vmatpush.msra.mxu0 0.0
    %53 = vmatpush.msra.mxu0 0.0
    %54 = vmatpush.msra.mxu0 %v29
    %55 = vmatpush.msra.mxu0 %v28
    %56 = vmatpush.msra.mxu0 %v27
    %57 = vmatpush.msra.mxu0 %v26
    %58 = vmatpush.msra.mxu0 %v25
    %59 = vmatmul.f32.gmra.mxu0 %v32
    %v60 = vpop.f32.mrf.mxu0
    %v61 = vadd.f32 0.0, %v60
    %62 = vmatmul.f32.gmra.mxu0 %v35
    %v63 = vpop.f32.mrf.mxu0
    %v64 = vadd.f32 0.0, %v63
    %65 = vmatmul.f32.gmra.mxu0 %v38
    %v66 = vpop.f32.mrf.mxu0
    %v67 = vadd.f32 0.0, %v66
    %68 = vmatmul.f32.gmra.mxu0 %v41
    %v69 = vpop.f32.mrf.mxu0
    %v70 = vadd.f32 0.0, %v69
    %71 = vdwg.mxu0
    %v72 = vld [vmem:[%s0] sm:$0x3]
    %v74 = vrot.slane %v72, 1
    %v75 = vperm.slane %v72, 0
    %v76 = vperm.slane %v74, 0
    %v79 = vadd.f32 %v61, %v75
    %v80 = vadd.f32 %v64, %v75
    %v81 = vadd.f32 %v67, %v76
    %v82 = vadd.f32 %v70, %v76
    %v83 = vtanh.pop %v79
    %v84 = vtanh.pop %v80
    %v85 = vtanh.pop %v81
    %v86 = vtanh.pop %v82
    %v87 = vld [vmem:[%s3] sm:$0x1]
    %v89 = vperm.slane %v87, 0
    %v91 = vmul.f32 %v83, %v89
    %v92 = vmul.f32 %v84, %v89
    %v93 = vmul.f32 %v85, %v89
    %v94 = vmul.f32 %v86, %v89
    %vm95 = vcmask 261120
    %v96 = vsel %vm95, %v91, 0.0
    %97 = vadd.xlane.f32.xlu0 %v96
    %v98 = vpop.xlane.xlu0 %97
    %v99 = vsel %vm95, %v92, 0.0
    %100 = vadd.xlane.f32.xlu0 %v99
    %v101 = vpop.xlane.xlu0 %100
    %v102 = vsel %vm95, %v93, 0.0
    %103 = vadd.xlane.f32.xlu0 %v102
    %v104 = vpop.xlane.xlu0 %103
    %v105 = vsel %vm95, %v94, 0.0
    %106 = vadd.xlane.f32.xlu0 %v105
    %v107 = vpop.xlane.xlu0 %106
    %v112 = vlaneseq
    %v113 = vand.u32 %v112, 127
    %v114 = vperm.slane %v98, %v113
    %v115 = vadd.s32 %v113, 4294967288
    %v116 = vperm.slane %v101, %v115
    %vm117 = vcmask 130112
    %v118 = vsel %vm117, %v116, %v114
    %v119 = vperm.slane %v104, %v113
    %v120 = vperm.slane %v107, %v115
    %v121 = vsel %vm117, %v120, %v119
    %vm122 = vcmask 1041409
    %v123 = vsel %vm122, %v121, %v118
    %vm125 = vcmask 123904
    %v126 = vsel %vm125, %v123, -inf
    %127 = vmax.xlane.f32.xlu0 %v126
    %v128 = vpop.xlane.xlu0 %127
    %v130 = vperm.slane %v128, 0
    %v131 = vperm.slane %v128, 1
    %v134 = vsub.f32 %v98, %v130
    %v135 = vsub.f32 %v101, %v130
    %v136 = vsub.f32 %v104, %v131
    %v137 = vsub.f32 %v107, %v131
    %v138 = vmul.f32 %v134, 1.442695
    %v139 = vpow.pop %v138
    %v140 = vmul.f32 %v135, 1.442695
    %v141 = vpow.pop %v140
    %v142 = vmul.f32 %v136, 1.442695
    %v143 = vpow.pop %v142
    %v144 = vmul.f32 %v137, 1.442695
    %v145 = vpow.pop %v144
    %150 = vset.pattern.permute.xlu0 0
    %151 = vperm.xlu0 %150, %v139
    %v152 = vpop.permute.xlu0 %151
    %153 = vset.pattern.permute.xlu0 0
    %154 = vperm.xlu0 %153, %v141
    %v155 = vpop.permute.xlu0 %154
    %156 = vset.pattern.permute.xlu0 0
    %157 = vperm.xlu0 %156, %v143
    %v158 = vpop.permute.xlu0 %157
    %159 = vset.pattern.permute.xlu0 0
    %160 = vperm.xlu0 %159, %v145
    %v161 = vpop.permute.xlu0 %160
    %v162 = vperm.slane %v152, %v113
    %v163 = vperm.slane %v155, %v115
    %v164 = vsel %vm117, %v163, %v162
    %v165 = vperm.slane %v158, %v113
    %v166 = vperm.slane %v161, %v115
    %v167 = vsel %vm117, %v166, %v165
    %v168 = vsel %vm122, %v167, %v164
    %v170 = vsel %vm125, %v168, 0.0
    %171 = vadd.xlane.f32.xlu0 %v170
    %v172 = vpop.xlane.xlu0 %171
    %v174 = vperm.slane %v172, 0
    %v175 = vperm.slane %v172, 1
    %v178 = vrcp.pop %v174
    %v179 = vmul.f32 %v174, %v178
    %v180 = vsub.f32 1.0, %v179
    %v181 = vmul.f32 %v178, %v180
    %v182 = vadd.f32 %v178, %v181
    %vm183 = vweird.f32 %v174
    %vm184 = vweird.f32 %v178
    %vm185 = vmor %vm183, %vm184
    %v186 = vsel %vm185, %v178, %v182
    %v187 = vand.u32 2147483647, %v174
    %vm188 = vcmp.eq.f32.partialorder %v187, 8.507059e+37
    %v189 = vand.u32 %v174, 2147483648
    %v190 = vor.u32 1.1754944e-38, %v189
    %v191 = vsel %vm188, %v190, %v186
    %v192 = vmul.f32 %v139, %v191
    %v193 = vmul.f32 %v141, %v191
    %v194 = vrcp.pop %v175
    %v195 = vmul.f32 %v175, %v194
    %v196 = vsub.f32 1.0, %v195
    %v197 = vmul.f32 %v194, %v196
    %v198 = vadd.f32 %v194, %v197
    %vm199 = vweird.f32 %v175
    %vm200 = vweird.f32 %v194
    %vm201 = vmor %vm199, %vm200
    %v202 = vsel %vm201, %v194, %v198
    %v203 = vand.u32 2147483647, %v175
    %vm204 = vcmp.eq.f32.partialorder %v203, 8.507059e+37
    %v205 = vand.u32 %v175, 2147483648
    %v206 = vor.u32 1.1754944e-38, %v205
    %v207 = vsel %vm204, %v206, %v202
    %v208 = vmul.f32 %v143, %v207
    %v209 = vmul.f32 %v145, %v207
    %214 = vset.pattern.permute.xlu0 0
    %215 = vperm.xlu0 %214, %v192
    %v216 = vpop.permute.xlu0 %215
    %217 = vset.pattern.permute.xlu0 0
    %218 = vperm.xlu0 %217, %v193
    %v219 = vpop.permute.xlu0 %218
    %220 = vset.pattern.permute.xlu0 0
    %221 = vperm.xlu0 %220, %v208
    %v222 = vpop.permute.xlu0 %221
    %223 = vset.pattern.permute.xlu0 0
    %224 = vperm.xlu0 %223, %v209
    %v225 = vpop.permute.xlu0 %224
    %v226 = vperm.slane %v216, %v113
    %v227 = vperm.slane %v219, %v115
    %v228 = vsel %vm117, %v227, %v226
    %v229 = vperm.slane %v222, %v113
    %v230 = vperm.slane %v225, %v115
    %v231 = vsel %vm117, %v230, %v229
    %v232 = vsel %vm122, %v231, %v228
    %234 = vst.msk [vmem:[#allocation2] sm:$0x3] %vm125, %v232
    %v239 = vmul.f32 %v216, %v21
    %v240 = vmul.f32 %v219, %v22
    %v241 = vmul.f32 %v222, %v23
    %v242 = vmul.f32 %v225, %v24
    %v243 = vsel %vm30, %v239, 0.0
    %v244 = vsel %vm30, %v240, 0.0
    %v245 = vadd.f32 %v243, %v244
    %v246 = vrot.slane %v245, 4
    %v247 = vadd.f32 %v245, %v246
    %v248 = vrot.slane %v247, 2
    %v249 = vadd.f32 %v247, %v248
    %v250 = vrot.slane %v249, 1
    %v251 = vadd.f32 %v249, %v250
    %v252 = vsel %vm30, %v241, 0.0
    %v253 = vsel %vm30, %v242, 0.0
    %v254 = vadd.f32 %v252, %v253
    %v255 = vrot.slane %v254, 4
    %v256 = vadd.f32 %v254, %v255
    %v257 = vrot.slane %v256, 2
    %v258 = vadd.f32 %v256, %v257
    %v259 = vrot.slane %v258, 1
    %v260 = vadd.f32 %v258, %v259
    %v263 = vsel %vm122, %v260, %v251
    %vm265 = vcmask 320512
    %266 = vst.msk [vmem:[#allocation4] sm:$0x3] %vm265, %v263
    // Predicated region
    $region18: #{tpu_custom_call.1} parent=1 // pred_check
      _
    $region19: #{tpu_custom_call.1} parent=1 // pred_check_branch
      %268 = sbr.rel (0) target = $region21
    $region20: #{tpu_custom_call.1} parent=1 // pred_region
      %270 = vsyncadd [#allocation3], 0
      %s272 = sshll.u32 [#allocation2], 4
      %s273 = int_to_ptr.vmem [resolvable:$true] %s272
      %s274 = sshll.u32 %s4, 4
      %s275 = int_to_ptr.hbm [resolvable:$true] %s274
      %277 = dma.vmem_to_hbm [thread:$0]  %s273, 32, %s275, [#allocation3]
    $region21: #{tpu_custom_call.1} parent=1 // pred_fallthru
      _
    // Predicated region
    $region22: #{tpu_custom_call.1} parent=1 // pred_check
      _
    $region23: #{tpu_custom_call.1} parent=1 // pred_check_branch
      %279 = sbr.rel (0) target = $region25
    $region24: #{tpu_custom_call.1} parent=1 // pred_region
      %281 = vsyncadd [#allocation5], 0
      %s283 = sshll.u32 [#allocation4], 4
      %s284 = int_to_ptr.vmem [resolvable:$true] %s283
      %s285 = sshll.u32 %s5, 4
      %s286 = int_to_ptr.hbm [resolvable:$true] %s285
      %288 = dma.vmem_to_hbm [thread:$0]  %s284, 32, %s286, [#allocation5]
    $region25: #{tpu_custom_call.1} parent=1 // pred_fallthru
      _
    // Predicated region
    $region26: #{tpu_custom_call.1} parent=1 // pred_check
      _
    $region27: #{tpu_custom_call.1} parent=1 // pred_check_branch
      %290 = sbr.rel (0) target = $region29
    $region28: #{tpu_custom_call.1} parent=1 // pred_region
      %292 = dma.done [#allocation3], 32
    $region29: #{tpu_custom_call.1} parent=1 // pred_fallthru
      _
    // Predicated region
    $region30: #{tpu_custom_call.1} parent=1 // pred_check
      _
    $region31: #{tpu_custom_call.1} parent=1 // pred_check_branch
      %294 = sbr.rel (0) target = $region33
    $region32: #{tpu_custom_call.1} parent=1 // pred_region
      %296 = dma.done [#allocation5], 32
    $region33: #{tpu_custom_call.1} parent=1 // pred_fallthru
      _
    %297 = vsyncpa [#allocation3], 1
    %298 = vsyncpa [#allocation5], 1

</llo_original>
